<compile_context>
chip_gen: v5e
topology: v5e:2x2
jax: 0.10.0
libtpu: 0.0.40
codegen_flags: <defaults>
</compile_context>

<pallas_src>
import math

import jax
import jax.numpy as jnp
from jax.experimental import pallas as pl
from jax.experimental.pallas import tpu as pltpu


def _conv1x1_kernel(x_ref, w_ref, b_ref, o_ref):
    """Per-voxel channel mixing on a dense (R, LANE) spatial slab.

    x_ref: (C_in, R, LANE)  VMEM
    w_ref: (C_out, C_in)    SMEM scalars
    b_ref: (C_out,)         SMEM scalars
    o_ref: (C_out, R, LANE) VMEM
    """
    c_in = x_ref.shape[0]
    c_out = o_ref.shape[0]
    # Fully unrolled (tiny channel counts): pure VPU scalar*slab FMAs,
    # f32 accumulation (safe on v5e which has no bf16 VALU).
    for o in range(c_out):
        acc = x_ref[0].astype(jnp.float32) * w_ref[o, 0]
        for c in range(1, c_in):
            acc = acc + x_ref[c].astype(jnp.float32) * w_ref[o, c]
        o_ref[o] = (acc + b_ref[o]).astype(o_ref.dtype)


def output_block_forward(x, weight, bias, *, lane=512,
                         target_block_bytes=2 * 1024 * 1024):
    """1x1x1 Conv3d.

    x: (N, C_in, D, H, W) NCDHW; weight: (C_out, C_in); bias: (C_out,).
    Returns (N, C_out, D, H, W).
    """
    N, C_in, D, H, W = x.shape
    C_out = weight.shape[0]
    S = D * H * W
    itemsize = jnp.dtype(x.dtype).itemsize

    # Free reshape (no transpose): spatial axis stays last / lane-dense.
    x3 = x.reshape(N, C_in, S)

    # Pad spatial extent to a multiple of `lane` (no-op when already aligned).
    # Compute is independent per voxel, so padded elements are harmless and
    # are sliced away at the end.
    S_pad = ((S + lane - 1) // lane) * lane
    if S_pad != S:
        x3 = jnp.pad(x3, ((0, 0), (0, 0), (0, S_pad - S)))
    rows = S_pad // lane
    x4 = x3.reshape(N, C_in, rows, lane)  # still a free reshape: same layout

    # Rows per block: ~target_block_bytes of input per grid step, multiple of
    # 8 (f32 sublane tiling), clamped to the full row extent.
    r = max(1, target_block_bytes // (C_in * lane * itemsize))
    r = max(8, (r // 8) * 8)
    r = min(r, rows)
    # v7x has 2 TCs: keep the parallel grid >= ~4 steps when we can afford it.
    while r > 8 and N * pl.cdiv(rows, r) < 4:
        r = max(8, ((r // 2) // 8) * 8)

    grid = (N, pl.cdiv(rows, r))

    cost = pl.CostEstimate(
        flops=2 * N * S * C_in * C_out,
        transcendentals=0,
        bytes_accessed=N * S * (C_in + C_out) * itemsize,
    )

    y4 = pl.pallas_call(
        _conv1x1_kernel,
        out_shape=jax.ShapeDtypeStruct((N, C_out, rows, lane), x.dtype),
        grid=grid,
        in_specs=[
            # (None, ...) squeezes the batch dim; kernel sees (C_in, r, lane).
            pl.BlockSpec((None, C_in, r, lane), lambda n, s: (n, 0, s, 0)),
            # Tiny weight/bias: resident SMEM scalars (DMA'd once, untiled).
            pl.BlockSpec(memory_space=pltpu.MemorySpace.SMEM),
            pl.BlockSpec(memory_space=pltpu.MemorySpace.SMEM),
        ],
        out_specs=pl.BlockSpec((None, C_out, r, lane), lambda n, s: (n, 0, s, 0)),
        compiler_params=pltpu.CompilerParams(
            dimension_semantics=("parallel", "parallel")),
        cost_estimate=cost,
    )(x4, weight, bias)

    y3 = y4.reshape(N, C_out, S_pad)
    if S_pad != S:
        y3 = y3[:, :, :S]
    return y3.reshape(N, C_out, D, H, W)


if __name__ == "__main__":
    key = jax.random.PRNGKey(0)
    kx, kw, kb = jax.random.split(key, 3)

    N, C_in, C_out = 2, 4, 3
    D = H = W = 16  # S = 4096 -> rows = 8 (lane=512), grid (2, 1)

    x = jax.random.normal(kx, (N, C_in, D, H, W), dtype=jnp.float32)

    # Deterministic parameter init mimicking nn.Conv3d default:
    # fan_in = C_in * 1 * 1 * 1; bound = 1/sqrt(fan_in)
    bound = 1.0 / math.sqrt(C_in)
    weight = jax.random.uniform(kw, (C_out, C_in), jnp.float32, -bound, bound)
    bias = jax.random.uniform(kb, (C_out,), jnp.float32, -bound, bound)

    y = output_block_forward(x, weight, bias)
    y = jax.block_until_ready(y)

    # Reference in plain JAX.
    y_ref = jnp.einsum("ncdhw,oc->nodhw", x, weight) + bias[None, :, None, None, None]
    assert y.shape == (N, C_out, D, H, W)
    assert jnp.allclose(y, y_ref, atol=1e-5, rtol=1e-5)

    print("KERNEL_OK")
</pallas_src>

<mosaic_0001>
module attributes {stable_mosaic.version = 11 : i64} {
  func.func @_conv1x1_kernel(%arg0: i32, %arg1: i32, %arg2: memref<1x4x8x512xf32, #tpu.memory_space<vmem>>, %arg3: memref<3x4xf32, #tpu.memory_space<smem>>, %arg4: memref<3xf32, #tpu.memory_space<smem>>, %arg5: memref<1x3x8x512xf32, #tpu.memory_space<vmem>>) attributes {dimension_semantics = [#tpu.dimension_semantics<parallel>, #tpu.dimension_semantics<parallel>], iteration_bounds = array<i64: 2, 1>, scalar_prefetch = 0 : i64, scratch_operands = 0 : i64, tpu.core_type = #tpu.core_type<tc>, window_params = [{transform_indices = @transform_0, window_bounds = array<i64: 1, 4, 8, 512>}, {transform_indices = @transform_1, window_bounds = array<i64: 3, 4>}, {transform_indices = @transform_2, window_bounds = array<i64: 3>}, {transform_indices = @transform_3, window_bounds = array<i64: 1, 3, 8, 512>}]} {
    %c0 = arith.constant 0 : index
    %c0_0 = arith.constant 0 : index
    %c0_1 = arith.constant 0 : index
    %c0_2 = arith.constant 0 : index
    %0 = vector.load %arg2[%c0, %c0_0, %c0_1, %c0_2] : memref<1x4x8x512xf32, #tpu.memory_space<vmem>>, vector<1x1x8x512xf32>
    %1 = vector.shape_cast %0 : vector<1x1x8x512xf32> to vector<8x512xf32>
    %c0_3 = arith.constant 0 : index
    %c0_4 = arith.constant 0 : index
    %2 = memref.load %arg3[%c0_3, %c0_4] : memref<3x4xf32, #tpu.memory_space<smem>>
    %3 = vector.broadcast %2 : f32 to vector<8x512xf32>
    %4 = arith.mulf %1, %3 : vector<8x512xf32>
    %c0_5 = arith.constant 0 : index
    %c1 = arith.constant 1 : index
    %c0_6 = arith.constant 0 : index
    %c0_7 = arith.constant 0 : index
    %5 = vector.load %arg2[%c0_5, %c1, %c0_6, %c0_7] : memref<1x4x8x512xf32, #tpu.memory_space<vmem>>, vector<1x1x8x512xf32>
    %6 = vector.shape_cast %5 : vector<1x1x8x512xf32> to vector<8x512xf32>
    %c0_8 = arith.constant 0 : index
    %c1_9 = arith.constant 1 : index
    %7 = memref.load %arg3[%c0_8, %c1_9] : memref<3x4xf32, #tpu.memory_space<smem>>
    %8 = vector.broadcast %7 : f32 to vector<8x512xf32>
    %9 = arith.mulf %6, %8 : vector<8x512xf32>
    %10 = arith.addf %4, %9 : vector<8x512xf32>
    %c0_10 = arith.constant 0 : index
    %c2 = arith.constant 2 : index
    %c0_11 = arith.constant 0 : index
    %c0_12 = arith.constant 0 : index
    %11 = vector.load %arg2[%c0_10, %c2, %c0_11, %c0_12] : memref<1x4x8x512xf32, #tpu.memory_space<vmem>>, vector<1x1x8x512xf32>
    %12 = vector.shape_cast %11 : vector<1x1x8x512xf32> to vector<8x512xf32>
    %c0_13 = arith.constant 0 : index
    %c2_14 = arith.constant 2 : index
    %13 = memref.load %arg3[%c0_13, %c2_14] : memref<3x4xf32, #tpu.memory_space<smem>>
    %14 = vector.broadcast %13 : f32 to vector<8x512xf32>
    %15 = arith.mulf %12, %14 : vector<8x512xf32>
    %16 = arith.addf %10, %15 : vector<8x512xf32>
    %c0_15 = arith.constant 0 : index
    %c3 = arith.constant 3 : index
    %c0_16 = arith.constant 0 : index
    %c0_17 = arith.constant 0 : index
    %17 = vector.load %arg2[%c0_15, %c3, %c0_16, %c0_17] : memref<1x4x8x512xf32, #tpu.memory_space<vmem>>, vector<1x1x8x512xf32>
    %18 = vector.shape_cast %17 : vector<1x1x8x512xf32> to vector<8x512xf32>
    %c0_18 = arith.constant 0 : index
    %c3_19 = arith.constant 3 : index
    %19 = memref.load %arg3[%c0_18, %c3_19] : memref<3x4xf32, #tpu.memory_space<smem>>
    %20 = vector.broadcast %19 : f32 to vector<8x512xf32>
    %21 = arith.mulf %18, %20 : vector<8x512xf32>
    %22 = arith.addf %16, %21 : vector<8x512xf32>
    %c0_20 = arith.constant 0 : index
    %23 = memref.load %arg4[%c0_20] : memref<3xf32, #tpu.memory_space<smem>>
    %24 = vector.broadcast %23 : f32 to vector<8x512xf32>
    %25 = arith.addf %22, %24 : vector<8x512xf32>
    %c0_21 = arith.constant 0 : index
    %c0_22 = arith.constant 0 : index
    %c0_23 = arith.constant 0 : index
    %c0_24 = arith.constant 0 : index
    %26 = vector.load %arg5[%c0_21, %c0_22, %c0_23, %c0_24] : memref<1x3x8x512xf32, #tpu.memory_space<vmem>>, vector<1x1x8x512xf32>
    %27 = vector.shape_cast %26 : vector<1x1x8x512xf32> to vector<8x512xf32>
    %28 = vector.shape_cast %25 : vector<8x512xf32> to vector<1x1x8x512xf32>
    tpu.vector_store %arg5[%c0_21, %c0_22, %c0_23, %c0_24], %28 {strides = array<i32>} : memref<1x3x8x512xf32, #tpu.memory_space<vmem>>, vector<1x1x8x512xf32>,
    %c0_25 = arith.constant 0 : index
    %c0_26 = arith.constant 0 : index
    %c0_27 = arith.constant 0 : index
    %c0_28 = arith.constant 0 : index
    %29 = vector.load %arg2[%c0_25, %c0_26, %c0_27, %c0_28] : memref<1x4x8x512xf32, #tpu.memory_space<vmem>>, vector<1x1x8x512xf32>
    %30 = vector.shape_cast %29 : vector<1x1x8x512xf32> to vector<8x512xf32>
    %c1_29 = arith.constant 1 : index
    %c0_30 = arith.constant 0 : index
    %31 = memref.load %arg3[%c1_29, %c0_30] : memref<3x4xf32, #tpu.memory_space<smem>>
    %32 = vector.broadcast %31 : f32 to vector<8x512xf32>
    %33 = arith.mulf %30, %32 : vector<8x512xf32>
    %c0_31 = arith.constant 0 : index
    %c1_32 = arith.constant 1 : index
    %c0_33 = arith.constant 0 : index
    %c0_34 = arith.constant 0 : index
    %34 = vector.load %arg2[%c0_31, %c1_32, %c0_33, %c0_34] : memref<1x4x8x512xf32, #tpu.memory_space<vmem>>, vector<1x1x8x512xf32>
    %35 = vector.shape_cast %34 : vector<1x1x8x512xf32> to vector<8x512xf32>
    %c1_35 = arith.constant 1 : index
    %c1_36 = arith.constant 1 : index
    %36 = memref.load %arg3[%c1_35, %c1_36] : memref<3x4xf32, #tpu.memory_space<smem>>
    %37 = vector.broadcast %36 : f32 to vector<8x512xf32>
    %38 = arith.mulf %35, %37 : vector<8x512xf32>
    %39 = arith.addf %33, %38 : vector<8x512xf32>
    %c0_37 = arith.constant 0 : index
    %c2_38 = arith.constant 2 : index
    %c0_39 = arith.constant 0 : index
    %c0_40 = arith.constant 0 : index
    %40 = vector.load %arg2[%c0_37, %c2_38, %c0_39, %c0_40] : memref<1x4x8x512xf32, #tpu.memory_space<vmem>>, vector<1x1x8x512xf32>
    %41 = vector.shape_cast %40 : vector<1x1x8x512xf32> to vector<8x512xf32>
    %c1_41 = arith.constant 1 : index
    %c2_42 = arith.constant 2 : index
    %42 = memref.load %arg3[%c1_41, %c2_42] : memref<3x4xf32, #tpu.memory_space<smem>>
    %43 = vector.broadcast %42 : f32 to vector<8x512xf32>
    %44 = arith.mulf %41, %43 : vector<8x512xf32>
    %45 = arith.addf %39, %44 : vector<8x512xf32>
    %c0_43 = arith.constant 0 : index
    %c3_44 = arith.constant 3 : index
    %c0_45 = arith.constant 0 : index
    %c0_46 = arith.constant 0 : index
    %46 = vector.load %arg2[%c0_43, %c3_44, %c0_45, %c0_46] : memref<1x4x8x512xf32, #tpu.memory_space<vmem>>, vector<1x1x8x512xf32>
    %47 = vector.shape_cast %46 : vector<1x1x8x512xf32> to vector<8x512xf32>
    %c1_47 = arith.constant 1 : index
    %c3_48 = arith.constant 3 : index
    %48 = memref.load %arg3[%c1_47, %c3_48] : memref<3x4xf32, #tpu.memory_space<smem>>
    %49 = vector.broadcast %48 : f32 to vector<8x512xf32>
    %50 = arith.mulf %47, %49 : vector<8x512xf32>
    %51 = arith.addf %45, %50 : vector<8x512xf32>
    %c1_49 = arith.constant 1 : index
    %52 = memref.load %arg4[%c1_49] : memref<3xf32, #tpu.memory_space<smem>>
    %53 = vector.broadcast %52 : f32 to vector<8x512xf32>
    %54 = arith.addf %51, %53 : vector<8x512xf32>
    %c0_50 = arith.constant 0 : index
    %c1_51 = arith.constant 1 : index
    %c0_52 = arith.constant 0 : index
    %c0_53 = arith.constant 0 : index
    %55 = vector.load %arg5[%c0_50, %c1_51, %c0_52, %c0_53] : memref<1x3x8x512xf32, #tpu.memory_space<vmem>>, vector<1x1x8x512xf32>
    %56 = vector.shape_cast %55 : vector<1x1x8x512xf32> to vector<8x512xf32>
    %57 = vector.shape_cast %54 : vector<8x512xf32> to vector<1x1x8x512xf32>
    tpu.vector_store %arg5[%c0_50, %c1_51, %c0_52, %c0_53], %57 {strides = array<i32>} : memref<1x3x8x512xf32, #tpu.memory_space<vmem>>, vector<1x1x8x512xf32>,
    %c0_54 = arith.constant 0 : index
    %c0_55 = arith.constant 0 : index
    %c0_56 = arith.constant 0 : index
    %c0_57 = arith.constant 0 : index
    %58 = vector.load %arg2[%c0_54, %c0_55, %c0_56, %c0_57] : memref<1x4x8x512xf32, #tpu.memory_space<vmem>>, vector<1x1x8x512xf32>
    %59 = vector.shape_cast %58 : vector<1x1x8x512xf32> to vector<8x512xf32>
    %c2_58 = arith.constant 2 : index
    %c0_59 = arith.constant 0 : index
    %60 = memref.load %arg3[%c2_58, %c0_59] : memref<3x4xf32, #tpu.memory_space<smem>>
    %61 = vector.broadcast %60 : f32 to vector<8x512xf32>
    %62 = arith.mulf %59, %61 : vector<8x512xf32>
    %c0_60 = arith.constant 0 : index
    %c1_61 = arith.constant 1 : index
    %c0_62 = arith.constant 0 : index
    %c0_63 = arith.constant 0 : index
    %63 = vector.load %arg2[%c0_60, %c1_61, %c0_62, %c0_63] : memref<1x4x8x512xf32, #tpu.memory_space<vmem>>, vector<1x1x8x512xf32>
    %64 = vector.shape_cast %63 : vector<1x1x8x512xf32> to vector<8x512xf32>
    %c2_64 = arith.constant 2 : index
    %c1_65 = arith.constant 1 : index
    %65 = memref.load %arg3[%c2_64, %c1_65] : memref<3x4xf32, #tpu.memory_space<smem>>
    %66 = vector.broadcast %65 : f32 to vector<8x512xf32>
    %67 = arith.mulf %64, %66 : vector<8x512xf32>
    %68 = arith.addf %62, %67 : vector<8x512xf32>
    %c0_66 = arith.constant 0 : index
    %c2_67 = arith.constant 2 : index
    %c0_68 = arith.constant 0 : index
    %c0_69 = arith.constant 0 : index
    %69 = vector.load %arg2[%c0_66, %c2_67, %c0_68, %c0_69] : memref<1x4x8x512xf32, #tpu.memory_space<vmem>>, vector<1x1x8x512xf32>
    %70 = vector.shape_cast %69 : vector<1x1x8x512xf32> to vector<8x512xf32>
    %c2_70 = arith.constant 2 : index
    %c2_71 = arith.constant 2 : index
    %71 = memref.load %arg3[%c2_70, %c2_71] : memref<3x4xf32, #tpu.memory_space<smem>>
    %72 = vector.broadcast %71 : f32 to vector<8x512xf32>
    %73 = arith.mulf %70, %72 : vector<8x512xf32>
    %74 = arith.addf %68, %73 : vector<8x512xf32>
    %c0_72 = arith.constant 0 : index
    %c3_73 = arith.constant 3 : index
    %c0_74 = arith.constant 0 : index
    %c0_75 = arith.constant 0 : index
    %75 = vector.load %arg2[%c0_72, %c3_73, %c0_74, %c0_75] : memref<1x4x8x512xf32, #tpu.memory_space<vmem>>, vector<1x1x8x512xf32>
    %76 = vector.shape_cast %75 : vector<1x1x8x512xf32> to vector<8x512xf32>
    %c2_76 = arith.constant 2 : index
    %c3_77 = arith.constant 3 : index
    %77 = memref.load %arg3[%c2_76, %c3_77] : memref<3x4xf32, #tpu.memory_space<smem>>
    %78 = vector.broadcast %77 : f32 to vector<8x512xf32>
    %79 = arith.mulf %76, %78 : vector<8x512xf32>
    %80 = arith.addf %74, %79 : vector<8x512xf32>
    %c2_78 = arith.constant 2 : index
    %81 = memref.load %arg4[%c2_78] : memref<3xf32, #tpu.memory_space<smem>>
    %82 = vector.broadcast %81 : f32 to vector<8x512xf32>
    %83 = arith.addf %80, %82 : vector<8x512xf32>
    %c0_79 = arith.constant 0 : index
    %c2_80 = arith.constant 2 : index
    %c0_81 = arith.constant 0 : index
    %c0_82 = arith.constant 0 : index
    %84 = vector.load %arg5[%c0_79, %c2_80, %c0_81, %c0_82] : memref<1x3x8x512xf32, #tpu.memory_space<vmem>>, vector<1x1x8x512xf32>
    %85 = vector.shape_cast %84 : vector<1x1x8x512xf32> to vector<8x512xf32>
    %86 = vector.shape_cast %83 : vector<8x512xf32> to vector<1x1x8x512xf32>
    tpu.vector_store %arg5[%c0_79, %c2_80, %c0_81, %c0_82], %86 {strides = array<i32>} : memref<1x3x8x512xf32, #tpu.memory_space<vmem>>, vector<1x1x8x512xf32>,
    return
  }
  func.func @transform_0(%arg0: i32, %arg1: i32) -> (i32, i32, i32, i32) {
    %c0_i32 = arith.constant 0 : i32
    %c0_i32_0 = arith.constant 0 : i32
    %c0_i32_1 = arith.constant 0 : i32
    return %arg0, %c0_i32, %arg1, %c0_i32_0 : i32, i32, i32, i32
  }
  func.func @transform_1(%arg0: i32, %arg1: i32) -> (i32, i32) {
    %c0_i32 = arith.constant 0 : i32
    %c0_i32_0 = arith.constant 0 : i32
    %c0_i32_1 = arith.constant 0 : i32
    return %c0_i32, %c0_i32_0 : i32, i32
  }
  func.func @transform_2(%arg0: i32, %arg1: i32) -> i32 {
    %c0_i32 = arith.constant 0 : i32
    %c0_i32_0 = arith.constant 0 : i32
    return %c0_i32 : i32
  }
  func.func @transform_3(%arg0: i32, %arg1: i32) -> (i32, i32, i32, i32) {
    %c0_i32 = arith.constant 0 : i32
    %c0_i32_0 = arith.constant 0 : i32
    %c0_i32_1 = arith.constant 0 : i32
    return %arg0, %c0_i32, %arg1, %c0_i32_0 : i32, i32, i32, i32
  }
}

</mosaic_0001>

<llo_original>
// kernel: tpu_custom_call.1
$region0: #{tpu_custom_call.1}
  #allocation0 [shape = 'u32[]', space=smem, size = 0x4, offset = 0x4, fixed_abs, tag = 'smem constant byte address 0x4 - core index']
  #allocation1 [shape = 'u32[72,128]{1,0:T(1,128)}', space=vmem, size = 0x9000, scoped, tag = 'internal scratch']
  %s0 = inlined_call_operand.hbm [shape: f32[2,4,8,512], index: 0, kind: input, shape index: {}]
  %s1 = inlined_call_operand.hbm [shape: f32[3,4], index: 1, kind: input, shape index: {}]
  %s2 = inlined_call_operand.vmem [shape: f32[3], index: 2, kind: input, shape index: {}]
  %s3 = inlined_call_operand.hbm [shape: f32[2,3,8,512], index: 3, kind: output, shape index: {}]
  %s4 = sld [smem:[#allocation0]]
  $region57: #{tpu_custom_call.1} parent=0
    _
  %s6 = ssub.s32 1, %s4
  %s7 = scalar_select 0, %s6, %s4
  $region1: #{tpu_custom_call.1} parent=0
    #allocation2 [shape = 'u8[131072]{0}', space=vmem, size = 0x20000, scoped, tag = 'input window, operand 0']
    #allocation3 [shape = 's32[2]{0}', space=sflag, size = 0x8, scoped, tag = 'scoped memory for tpu_custom_call.1']
    #allocation4 [shape = 's32[2]{0}', space=sflag, size = 0x8, scoped, tag = 'scoped memory for tpu_custom_call.1']
    #allocation5 [shape = 's32[2]{0}', space=sflag, size = 0x8, scoped, tag = 'scoped memory for tpu_custom_call.1']
    #allocation6 [shape = 's32[2]{0}', space=sflag, size = 0x8, scoped, tag = 'scoped memory for tpu_custom_call.1']
    #allocation7 [shape = 'u8[2048]{0}', space=smem, size = 0x800, scoped, tag = 'input window, operand 1, single buffered']
    #allocation8 [shape = 'u8[512]{0}', space=smem, size = 0x200, scoped, tag = 'input window, operand 2, single buffered']
    #allocation9 [shape = 'u8[98304]{0}', space=vmem, size = 0x18000, scoped, tag = 'output window, operand 0']
    %8 = vsyncpa [#allocation3], 0
    %s9 = scalar_lea.sflag [#allocation3], 1
    %10 = vsyncpa %s9, 0
    %11 = vsyncpa [#allocation5], 0
    %12 = vsyncpa [#allocation6], 0
    %13 = vsyncpa [#allocation4], 0
    %s14 = scalar_lea.sflag [#allocation4], 1
    %15 = vsyncpa %s14, 0
    loop: start=0, step=1, limit=4
    $region2: #{tpu_custom_call.1} parent=1 // loop_pre_header
      _
    $region3: #{tpu_custom_call.1} parent=1 // loop_header
      %s17 = sphi 0, %s21
      %p18 = scmp.ge.s32.totalorder %s17, 4
      %s24 = sphi 0, %s36
      %s25 = sphi 0, %s32
      %s26 = sphi 0, %s24
      %s27 = sphi 0, %s25
      %s28 = sphi 0, %s26
      %s29 = sphi 0, %s27
      %s41 = sphi 0, %s43
      %s44 = sphi 0, %s41
      %s45 = sphi 0, %s44
      %s61 = sphi 0, %s45
      %s65 = sphi 0, %s65
      %s67 = sphi 0, %s65
      %s68 = sphi 0, %s67
      %s82 = sphi 0, %s68
      %s86 = sphi 0, %s86
      %s88 = sphi 0, %s86
      %s89 = sphi 0, %s88
      %s103 = sphi 0, %s89
      %s111 = sphi 0, %s113
      %s114 = sphi 0, %s111
      %s115 = sphi 0, %s114
      %s131 = sphi 0, %s115
    $region4: #{tpu_custom_call.1} parent=1 // loop_header_branch
      %20 = sbr.rel (%p18) target = $region8
    $region5: #{tpu_custom_call.1} parent=1 // loop_body
      %s22 = ssub.s32 %s17, 1
      %s23 = ssub.s32 %s17, 2
      %s30 = sadd.s32 1, %s25
      %p31 = scmp.ge.s32.totalorder %s30, 1
      %s32 = scalar_select %p31, 0, %s30
      %s33 = sadd.s32 1, %s24
      %s34 = scalar_select %p31, %s33, %s24
      %p35 = scmp.ge.s32.totalorder %s34, 2
      %s36 = scalar_select %p35, 0, %s34
      %s37 = ssub.s32 %s24, %s36
      %s38 = ssub.s32 %s25, %s32
      %s39 = sor.u32 %s37, %s38
      %p40 = scmp.eq.s32.totalorder %s39, 0
      %s42 = sadd.s32 %s41, 1
      %s43 = scalar_select %p40, %s41, %s42
      %p46 = pneg %p40
      %p47 = scmp.eq.s32.totalorder %s17, 1
      %p48 = por %p46, %p47
      %p49 = scmp.ne.s32.totalorder %s41, %s44
      %p50 = scmp.eq.s32.totalorder %s17, 0
      %p51 = por %p49, %p50
      %p52 = scmp.ne.s32.totalorder %s41, %s44
      %p53 = scmp.eq.s32.totalorder %s22, 1
      %p54 = por %p52, %p53
      %p55 = scmp.ne.s32.totalorder %s44, %s45
      %p56 = scmp.eq.s32.totalorder %s22, 0
      %p57 = por %p55, %p56
      %p58 = scmp.ne.s32.totalorder %s44, %s45
      %p59 = scmp.eq.s32.totalorder %s23, 1
      %p60 = por %p58, %p59
      %p62 = scmp.ne.s32.totalorder %s45, %s61
      %p63 = scmp.eq.s32.totalorder %s23, 0
      %p64 = por %p62, %p63
      %s66 = sadd.s32 %s65, 1
      %p69 = scmp.eq.s32.totalorder %s17, 1
      %p70 = scmp.ne.s32.totalorder %s65, %s67
      %p71 = scmp.eq.s32.totalorder %s17, 0
      %p72 = por %p70, %p71
      %p73 = scmp.ne.s32.totalorder %s65, %s67
      %p74 = scmp.eq.s32.totalorder %s22, 1
      %p75 = por %p73, %p74
      %p76 = scmp.ne.s32.totalorder %s67, %s68
      %p77 = scmp.eq.s32.totalorder %s22, 0
      %p78 = por %p76, %p77
      %p79 = scmp.ne.s32.totalorder %s67, %s68
      %p80 = scmp.eq.s32.totalorder %s23, 1
      %p81 = por %p79, %p80
      %p83 = scmp.ne.s32.totalorder %s68, %s82
      %p84 = scmp.eq.s32.totalorder %s23, 0
      %p85 = por %p83, %p84
      %s87 = sadd.s32 %s86, 1
      %p90 = scmp.eq.s32.totalorder %s17, 1
      %p91 = scmp.ne.s32.totalorder %s86, %s88
      %p92 = scmp.eq.s32.totalorder %s17, 0
      %p93 = por %p91, %p92
      %p94 = scmp.ne.s32.totalorder %s86, %s88
      %p95 = scmp.eq.s32.totalorder %s22, 1
      %p96 = por %p94, %p95
      %p97 = scmp.ne.s32.totalorder %s88, %s89
      %p98 = scmp.eq.s32.totalorder %s22, 0
      %p99 = por %p97, %p98
      %p100 = scmp.ne.s32.totalorder %s88, %s89
      %p101 = scmp.eq.s32.totalorder %s23, 1
      %p102 = por %p100, %p101
      %p104 = scmp.ne.s32.totalorder %s89, %s103
      %p105 = scmp.eq.s32.totalorder %s23, 0
      %p106 = por %p104, %p105
      %s107 = ssub.s32 %s24, %s36
      %s108 = ssub.s32 %s25, %s32
      %s109 = sor.u32 %s107, %s108
      %p110 = scmp.eq.s32.totalorder %s109, 0
      %s112 = sadd.s32 %s111, 1
      %s113 = scalar_select %p110, %s111, %s112
      %p116 = pneg %p110
      %p117 = scmp.eq.s32.totalorder %s17, 1
      %p118 = por %p116, %p117
      %p119 = scmp.ne.s32.totalorder %s111, %s114
      %p120 = scmp.eq.s32.totalorder %s17, 0
      %p121 = por %p119, %p120
      %p122 = scmp.ne.s32.totalorder %s111, %s114
      %p123 = scmp.eq.s32.totalorder %s22, 1
      %p124 = por %p122, %p123
      %p125 = scmp.ne.s32.totalorder %s114, %s115
      %p126 = scmp.eq.s32.totalorder %s22, 0
      %p127 = por %p125, %p126
      %p128 = scmp.ne.s32.totalorder %s114, %s115
      %p129 = scmp.eq.s32.totalorder %s23, 1
      %p130 = por %p128, %p129
      %p132 = scmp.ne.s32.totalorder %s115, %s131
      %p133 = scmp.eq.s32.totalorder %s23, 0
      %p134 = por %p132, %p133
      %p135 = scmp.le.s32.totalorder 1, %s17
      %p136 = scmp.lt.s32.totalorder %s17, 3
      %p137 = pnand %p135, %p136
      %p138 = pneg %p137
      // Predicated region
      $region9: #{tpu_custom_call.1} parent=5 // pred_check
        _
      $region10: #{tpu_custom_call.1} parent=5 // pred_check_branch
        %140 = sbr.rel (%p137) target = $region12
      $region11: #{tpu_custom_call.1} parent=5 // pred_region
        %s141 = ssub.s32 %s17, 1
        // Predicated region
        $region13: #{tpu_custom_call.1} parent=11 // pred_check
          %p142 = pneg %p78
        $region14: #{tpu_custom_call.1} parent=11 // pred_check_branch
          %144 = sbr.rel (%p142) target = $region16
        $region15: #{tpu_custom_call.1} parent=11 // pred_region
          %146 = vsyncadd [#allocation5], 0
          %s148 = sshll.u32 %s1, 4
          %s149 = int_to_ptr.hbm [resolvable:$true] %s148
          %151 = dma.hbm_to_smem %s149, 64, [#allocation7], [#allocation5]
        $region16: #{tpu_custom_call.1} parent=11 // pred_fallthru
          _
        // Predicated region
        $region17: #{tpu_custom_call.1} parent=11 // pred_check
          %p152 = pneg %p99
        $region18: #{tpu_custom_call.1} parent=11 // pred_check_branch
          %154 = sbr.rel (%p152) target = $region20
        $region19: #{tpu_custom_call.1} parent=11 // pred_region
          %156 = vsyncadd [#allocation6], 0
          %s158 = sshll.u32 %s2, 4
          %s159 = int_to_ptr.vmem [resolvable:$true] %s158
          %161 = dma.vmem_to_smem %s159, 16, [#allocation8], [#allocation6]
        $region20: #{tpu_custom_call.1} parent=11 // pred_fallthru
          _
      $region12: #{tpu_custom_call.1} parent=5 // pred_fallthru
        _
      %p162 = scmp.lt.s32.totalorder %s17, 2
      // Predicated region
      $region21: #{tpu_custom_call.1} parent=5 // pred_check
        %p163 = pneg %p162
      $region22: #{tpu_custom_call.1} parent=5 // pred_check_branch
        %165 = sbr.rel (%p163) target = $region24
      $region23: #{tpu_custom_call.1} parent=5 // pred_region
        // Predicated region
        $region25: #{tpu_custom_call.1} parent=23 // pred_check
          %p166 = pneg %p51
        $region26: #{tpu_custom_call.1} parent=23 // pred_check_branch
          %168 = sbr.rel (%p166) target = $region28
        $region27: #{tpu_custom_call.1} parent=23 // pred_region
          %s169 = sand.u32 %s41, 1
          %s170 = scalar_lea.sflag [#allocation3], %s169
          %s171 = sand.u32 %s41, 1
          %s172 = smul.addr %s171, 128
          %s173 = scalar_lea.vmem [#allocation2], %s172
          %175 = vsyncadd %s170, 0
          %s176 = smul.addr %s25, 4
          %s177 = smul.addr %s24, 16
          %s178 = sadd.s32 %s176, %s177
          %s179 = smul.addr %s178, 8
          %s180 = scalar_lea.hbm %s0, %s179
          %s181 = sshll.u32 %s180, 4
          %s182 = int_to_ptr.hbm [resolvable:$true] %s181
          %s183 = sshll.u32 %s173, 4
          %s184 = int_to_ptr.vmem [resolvable:$true] %s183
          %189 = dma.hbm_to_vmem [thread:$0]  %s182, 2048, %s184, %s170, 512, 512, 32
        $region28: #{tpu_custom_call.1} parent=23 // pred_fallthru
          _
      $region24: #{tpu_custom_call.1} parent=5 // pred_fallthru
        _
      %p190 = scmp.le.s32.totalorder 1, %s17
      %p191 = scmp.lt.s32.totalorder %s17, 3
      %p192 = pnand %p190, %p191
      %p193 = pneg %p192
      // Predicated region
      $region29: #{tpu_custom_call.1} parent=5 // pred_check
        _
      $region30: #{tpu_custom_call.1} parent=5 // pred_check_branch
        %195 = sbr.rel (%p192) target = $region32
      $region31: #{tpu_custom_call.1} parent=5 // pred_region
        %s196 = ssub.s32 %s17, 1
        %s197 = sand.u32 %s44, 1
        %s198 = scalar_lea.sflag [#allocation3], %s197
        %s199 = sand.u32 %s44, 1
        %s200 = smul.addr %s199, 128
        %s201 = scalar_lea.vmem [#allocation2], %s200
        // Predicated region
        $region33: #{tpu_custom_call.1} parent=31 // pred_check
          %p202 = pneg %p57
        $region34: #{tpu_custom_call.1} parent=31 // pred_check_branch
          %204 = sbr.rel (%p202) target = $region36
        $region35: #{tpu_custom_call.1} parent=31 // pred_region
          %206 = dma.done %s198, 2048
        $region36: #{tpu_custom_call.1} parent=31 // pred_fallthru
          _
        // Predicated region
        $region37: #{tpu_custom_call.1} parent=31 // pred_check
          %p207 = pneg %p78
        $region38: #{tpu_custom_call.1} parent=31 // pred_check_branch
          %209 = sbr.rel (%p207) target = $region40
        $region39: #{tpu_custom_call.1} parent=31 // pred_region
          %211 = dma.done [#allocation5], 64
        $region40: #{tpu_custom_call.1} parent=31 // pred_fallthru
          _
        // Predicated region
        $region41: #{tpu_custom_call.1} parent=31 // pred_check
          %p212 = pneg %p99
        $region42: #{tpu_custom_call.1} parent=31 // pred_check_branch
          %214 = sbr.rel (%p212) target = $region44
        $region43: #{tpu_custom_call.1} parent=31 // pred_region
          %216 = dma.done [#allocation6], 16
        $region44: #{tpu_custom_call.1} parent=31 // pred_fallthru
          _
        %217 = sfence
        %s218 = sand.u32 %s44, 1
        %s219 = scalar_lea.sflag [#allocation3], %s218
        %s220 = sand.u32 %s44, 1
        %s221 = smul.addr %s220, 128
        %s222 = scalar_lea.vmem [#allocation2], %s221
        %p223 = pneg %p57
        %p224 = pneg %p54
        %p225 = pneg %p78
        %p226 = pneg %p75
        %p227 = pneg %p99
        %p228 = pneg %p96
        %p229 = pneg %p127
        %p230 = pneg %p124
        %s231 = sand.u32 %s114, 1
        %s232 = scalar_lea.sflag [#allocation4], %s231
        %s233 = sand.u32 %s114, 1
        %s234 = smul.addr %s233, 96
        %s235 = scalar_lea.vmem [#allocation9], %s234
        %v236 = vld [vmem:[%s201] sm:$0xff]
        %v237 = vld [vmem:[%s201 + $0x8] sm:$0xff]
        %v238 = vld [vmem:[%s201 + $0x10] sm:$0xff]
        %v239 = vld [vmem:[%s201 + $0x18] sm:$0xff]
        %s240 = sld [smem:[#allocation7]]
        %v241 = vstv %s240
        %v242 = vmul.f32 %v236, %v241
        %v243 = vmul.f32 %v237, %v241
        %v244 = vmul.f32 %v238, %v241
        %v245 = vmul.f32 %v239, %v241
        %s246 = scalar_lea.vmem %s201, 32 [#allocation2]
        %v247 = vld [vmem:[%s246] sm:$0xff]
        %v248 = vld [vmem:[%s246 + $0x8] sm:$0xff]
        %v249 = vld [vmem:[%s246 + $0x10] sm:$0xff]
        %v250 = vld [vmem:[%s246 + $0x18] sm:$0xff]
        %s251 = sld [smem:[#allocation7 + $0x1]]
        %v252 = vstv %s251
        %v253 = vmul.f32 %v247, %v252
        %v254 = vmul.f32 %v248, %v252
        %v255 = vmul.f32 %v249, %v252
        %v256 = vmul.f32 %v250, %v252
        %v257 = vadd.f32 %v242, %v253
        %v258 = vadd.f32 %v243, %v254
        %v259 = vadd.f32 %v244, %v255
        %v260 = vadd.f32 %v245, %v256
        %s261 = scalar_lea.vmem %s201, 64 [#allocation2]
        %v262 = vld [vmem:[%s261] sm:$0xff]
        %v263 = vld [vmem:[%s261 + $0x8] sm:$0xff]
        %v264 = vld [vmem:[%s261 + $0x10] sm:$0xff]
        %v265 = vld [vmem:[%s261 + $0x18] sm:$0xff]
        %s266 = sld [smem:[#allocation7 + $0x2]]
        %v267 = vstv %s266
        %v268 = vmul.f32 %v262, %v267
        %v269 = vmul.f32 %v263, %v267
        %v270 = vmul.f32 %v264, %v267
        %v271 = vmul.f32 %v265, %v267
        %v272 = vadd.f32 %v257, %v268
        %v273 = vadd.f32 %v258, %v269
        %v274 = vadd.f32 %v259, %v270
        %v275 = vadd.f32 %v260, %v271
        %s276 = scalar_lea.vmem %s201, 96 [#allocation2]
        %v277 = vld [vmem:[%s276] sm:$0xff]
        %v278 = vld [vmem:[%s276 + $0x8] sm:$0xff]
        %v279 = vld [vmem:[%s276 + $0x10] sm:$0xff]
        %v280 = vld [vmem:[%s276 + $0x18] sm:$0xff]
        %s281 = sld [smem:[#allocation7 + $0x3]]
        %v282 = vstv %s281
        %v283 = vmul.f32 %v277, %v282
        %v284 = vmul.f32 %v278, %v282
        %v285 = vmul.f32 %v279, %v282
        %v286 = vmul.f32 %v280, %v282
        %v287 = vadd.f32 %v272, %v283
        %v288 = vadd.f32 %v273, %v284
        %v289 = vadd.f32 %v274, %v285
        %v290 = vadd.f32 %v275, %v286
        %s291 = sld [smem:[#allocation8]]
        %v292 = vstv %s291
        %v293 = vadd.f32 %v287, %v292
        %v294 = vadd.f32 %v288, %v292
        %v295 = vadd.f32 %v289, %v292
        %v296 = vadd.f32 %v290, %v292
        %297 = vst [vmem:[%s235] sm:$0xff] %v293
        %298 = vst [vmem:[%s235 + $0x8] sm:$0xff] %v294
        %299 = vst [vmem:[%s235 + $0x10] sm:$0xff] %v295
        %300 = vst [vmem:[%s235 + $0x18] sm:$0xff] %v296
        %v301 = vld [vmem:[%s201] sm:$0xff]
        %v302 = vld [vmem:[%s201 + $0x8] sm:$0xff]
        %v303 = vld [vmem:[%s201 + $0x10] sm:$0xff]
        %v304 = vld [vmem:[%s201 + $0x18] sm:$0xff]
        %s305 = sld [smem:[#allocation7 + $0x80]]
        %v306 = vstv %s305
        %v307 = vmul.f32 %v301, %v306
        %v308 = vmul.f32 %v302, %v306
        %v309 = vmul.f32 %v303, %v306
        %v310 = vmul.f32 %v304, %v306
        %v311 = vld [vmem:[%s246] sm:$0xff]
        %v312 = vld [vmem:[%s246 + $0x8] sm:$0xff]
        %v313 = vld [vmem:[%s246 + $0x10] sm:$0xff]
        %v314 = vld [vmem:[%s246 + $0x18] sm:$0xff]
        %s315 = sld [smem:[#allocation7 + $0x81]]
        %v316 = vstv %s315
        %v317 = vmul.f32 %v311, %v316
        %v318 = vmul.f32 %v312, %v316
        %v319 = vmul.f32 %v313, %v316
        %v320 = vmul.f32 %v314, %v316
        %v321 = vadd.f32 %v307, %v317
        %v322 = vadd.f32 %v308, %v318
        %v323 = vadd.f32 %v309, %v319
        %v324 = vadd.f32 %v310, %v320
        %v325 = vld [vmem:[%s261] sm:$0xff]
        %v326 = vld [vmem:[%s261 + $0x8] sm:$0xff]
        %v327 = vld [vmem:[%s261 + $0x10] sm:$0xff]
        %v328 = vld [vmem:[%s261 + $0x18] sm:$0xff]
        %s329 = sld [smem:[#allocation7 + $0x82]]
        %v330 = vstv %s329
        %v331 = vmul.f32 %v325, %v330
        %v332 = vmul.f32 %v326, %v330
        %v333 = vmul.f32 %v327, %v330
        %v334 = vmul.f32 %v328, %v330
        %v335 = vadd.f32 %v321, %v331
        %v336 = vadd.f32 %v322, %v332
        %v337 = vadd.f32 %v323, %v333
        %v338 = vadd.f32 %v324, %v334
        %v339 = vld [vmem:[%s276] sm:$0xff]
        %v340 = vld [vmem:[%s276 + $0x8] sm:$0xff]
        %v341 = vld [vmem:[%s276 + $0x10] sm:$0xff]
        %v342 = vld [vmem:[%s276 + $0x18] sm:$0xff]
        %s343 = sld [smem:[#allocation7 + $0x83]]
        %v344 = vstv %s343
        %v345 = vmul.f32 %v339, %v344
        %v346 = vmul.f32 %v340, %v344
        %v347 = vmul.f32 %v341, %v344
        %v348 = vmul.f32 %v342, %v344
        %v349 = vadd.f32 %v335, %v345
        %v350 = vadd.f32 %v336, %v346
        %v351 = vadd.f32 %v337, %v347
        %v352 = vadd.f32 %v338, %v348
        %s353 = sld [smem:[#allocation8 + $0x1]]
        %v354 = vstv %s353
        %v355 = vadd.f32 %v349, %v354
        %v356 = vadd.f32 %v350, %v354
        %v357 = vadd.f32 %v351, %v354
        %v358 = vadd.f32 %v352, %v354
        %s359 = scalar_lea.vmem %s235, 32 [#allocation9]
        %360 = vst [vmem:[%s359] sm:$0xff] %v355
        %361 = vst [vmem:[%s359 + $0x8] sm:$0xff] %v356
        %362 = vst [vmem:[%s359 + $0x10] sm:$0xff] %v357
        %363 = vst [vmem:[%s359 + $0x18] sm:$0xff] %v358
        %v364 = vld [vmem:[%s201] sm:$0xff]
        %v365 = vld [vmem:[%s201 + $0x8] sm:$0xff]
        %v366 = vld [vmem:[%s201 + $0x10] sm:$0xff]
        %v367 = vld [vmem:[%s201 + $0x18] sm:$0xff]
        %s368 = sld [smem:[#allocation7 + $0x100]]
        %v369 = vstv %s368
        %v370 = vmul.f32 %v364, %v369
        %v371 = vmul.f32 %v365, %v369
        %v372 = vmul.f32 %v366, %v369
        %v373 = vmul.f32 %v367, %v369
        %v374 = vld [vmem:[%s246] sm:$0xff]
        %v375 = vld [vmem:[%s246 + $0x8] sm:$0xff]
        %v376 = vld [vmem:[%s246 + $0x10] sm:$0xff]
        %v377 = vld [vmem:[%s246 + $0x18] sm:$0xff]
        %s378 = sld [smem:[#allocation7 + $0x101]]
        %v379 = vstv %s378
        %v380 = vmul.f32 %v374, %v379
        %v381 = vmul.f32 %v375, %v379
        %v382 = vmul.f32 %v376, %v379
        %v383 = vmul.f32 %v377, %v379
        %v384 = vadd.f32 %v370, %v380
        %v385 = vadd.f32 %v371, %v381
        %v386 = vadd.f32 %v372, %v382
        %v387 = vadd.f32 %v373, %v383
        %v388 = vld [vmem:[%s261] sm:$0xff]
        %v389 = vld [vmem:[%s261 + $0x8] sm:$0xff]
        %v390 = vld [vmem:[%s261 + $0x10] sm:$0xff]
        %v391 = vld [vmem:[%s261 + $0x18] sm:$0xff]
        %s392 = sld [smem:[#allocation7 + $0x102]]
        %v393 = vstv %s392
        %v394 = vmul.f32 %v388, %v393
        %v395 = vmul.f32 %v389, %v393
        %v396 = vmul.f32 %v390, %v393
        %v397 = vmul.f32 %v391, %v393
        %v398 = vadd.f32 %v384, %v394
        %v399 = vadd.f32 %v385, %v395
        %v400 = vadd.f32 %v386, %v396
        %v401 = vadd.f32 %v387, %v397
        %v402 = vld [vmem:[%s276] sm:$0xff]
        %v403 = vld [vmem:[%s276 + $0x8] sm:$0xff]
        %v404 = vld [vmem:[%s276 + $0x10] sm:$0xff]
        %v405 = vld [vmem:[%s276 + $0x18] sm:$0xff]
        %s406 = sld [smem:[#allocation7 + $0x103]]
        %v407 = vstv %s406
        %v408 = vmul.f32 %v402, %v407
        %v409 = vmul.f32 %v403, %v407
        %v410 = vmul.f32 %v404, %v407
        %v411 = vmul.f32 %v405, %v407
        %v412 = vadd.f32 %v398, %v408
        %v413 = vadd.f32 %v399, %v409
        %v414 = vadd.f32 %v400, %v410
        %v415 = vadd.f32 %v401, %v411
        %s416 = sld [smem:[#allocation8 + $0x2]]
        %v417 = vstv %s416
        %v418 = vadd.f32 %v412, %v417
        %v419 = vadd.f32 %v413, %v417
        %v420 = vadd.f32 %v414, %v417
        %v421 = vadd.f32 %v415, %v417
        %s422 = scalar_lea.vmem %s235, 64 [#allocation9]
        %423 = vst [vmem:[%s422] sm:$0xff] %v418
        %424 = vst [vmem:[%s422 + $0x8] sm:$0xff] %v419
        %425 = vst [vmem:[%s422 + $0x10] sm:$0xff] %v420
        %426 = vst [vmem:[%s422 + $0x18] sm:$0xff] %v421
        %s427 = sand.u32 %s114, 1
        %s428 = scalar_lea.sflag [#allocation4], %s427
        %s429 = sand.u32 %s114, 1
        %s430 = smul.addr %s429, 96
        %s431 = scalar_lea.vmem [#allocation9], %s430
        // Predicated region
        $region45: #{tpu_custom_call.1} parent=31 // pred_check
          %p432 = pneg %p124
        $region46: #{tpu_custom_call.1} parent=31 // pred_check_branch
          %434 = sbr.rel (%p432) target = $region48
        $region47: #{tpu_custom_call.1} parent=31 // pred_region
          %436 = vsyncadd %s428, 0
          %s437 = smul.addr %s27, 4
          %s438 = smul.addr %s26, 12
          %s439 = sadd.s32 %s437, %s438
          %s440 = smul.addr %s439, 8
          %s441 = scalar_lea.hbm %s3, %s440
          %s442 = sshll.u32 %s431, 4
          %s443 = int_to_ptr.vmem [resolvable:$true] %s442
          %s444 = sshll.u32 %s441, 4
          %s445 = int_to_ptr.hbm [resolvable:$true] %s444
          %450 = dma.vmem_to_hbm [thread:$0]  %s443, 1536, %s445, %s428, 512, 512, 32
        $region48: #{tpu_custom_call.1} parent=31 // pred_fallthru
          _
      $region32: #{tpu_custom_call.1} parent=5 // pred_fallthru
        _
      %p451 = scmp.le.s32.totalorder 2, %s17
      // Predicated region
      $region49: #{tpu_custom_call.1} parent=5 // pred_check
        %p452 = pneg %p451
      $region50: #{tpu_custom_call.1} parent=5 // pred_check_branch
        %454 = sbr.rel (%p452) target = $region52
      $region51: #{tpu_custom_call.1} parent=5 // pred_region
        %s455 = ssub.s32 %s17, 2
        // Predicated region
        $region53: #{tpu_custom_call.1} parent=51 // pred_check
          %p456 = pneg %p130
        $region54: #{tpu_custom_call.1} parent=51 // pred_check_branch
          %458 = sbr.rel (%p456) target = $region56
        $region55: #{tpu_custom_call.1} parent=51 // pred_region
          %s459 = sand.u32 %s115, 1
          %s460 = scalar_lea.sflag [#allocation4], %s459
          %s461 = sand.u32 %s115, 1
          %s462 = smul.addr %s461, 96
          %s463 = scalar_lea.vmem [#allocation9], %s462
          %465 = dma.done %s460, 1536
        $region56: #{tpu_custom_call.1} parent=51 // pred_fallthru
          _
      $region52: #{tpu_custom_call.1} parent=5 // pred_fallthru
        _
    $region6: #{tpu_custom_call.1} parent=1 // loop_footer
      %s21 = sadd.s32 1, %s17
    $region7: #{tpu_custom_call.1} parent=1 // loop_footer_branch
      %16 = sbr.rel target = $region3
    $region8: #{tpu_custom_call.1} parent=1 // loop_exit
      _
    %466 = vsyncpa [#allocation3], 1
    %s467 = scalar_lea.sflag [#allocation3], 1
    %468 = vsyncpa %s467, 1
    %469 = vsyncpa [#allocation4], 1
    %s470 = scalar_lea.sflag [#allocation4], 1
    %471 = vsyncpa %s470, 1
    %472 = vsyncpa [#allocation5], 1
    %s473 = scalar_lea.sflag [#allocation5], 1
    %474 = vsyncpa %s473, 1
    %475 = vsyncpa [#allocation6], 1
    %s476 = scalar_lea.sflag [#allocation6], 1
    %477 = vsyncpa %s476, 1

</llo_original>
